<compile_context>
chip_gen: v7x
topology: tpu7x:2x2x1
jax: 0.10.0
libtpu: 0.0.40
codegen_flags: <defaults>
</compile_context>

<pallas_src>
import functools

import jax
import jax.numpy as jnp
from jax import lax
from jax.experimental import pallas as pl
from jax.experimental.pallas import tpu as pltpu


def baseblock_kernel(x_ref, w1_ref, s1_ref, b1_ref, w2_ref, s2_ref, b2_ref,
                     out_ref):
    """Fused basic block for one image, lane-dense (H, W*C) layout.

    x_ref  : (1, H, W*C)        NHWC image with W and C merged (f32)
    w1_ref : (3*W*C, W*C)       block-banded conv1 weights (f32 or bf16)
    s1_ref : (1, W*C)           folded BN1 scale, tiled per lane (f32)
    b1_ref : (1, W*C)           folded BN1 bias (incl. conv1 bias) (f32)
    w2_ref : (3*W*C, W*C)       block-banded conv2 weights
    s2_ref : (1, W*C)           folded BN2 scale
    b2_ref : (1, W*C)           folded BN2 bias (incl. conv2 bias)
    out_ref: (1, H, W*C)        output
    """
    _, H, WC = x_ref.shape
    cdt = w1_ref.dtype          # MXU input dtype; accumulation stays f32

    x32 = x_ref[0]              # (H, WC) f32 — also the identity residual

    def row_patch(rows):
        # rows: (H, WC) f32 -> (H, 3*WC) = [row above | row | row below],
        # with zero rows at the top/bottom border (SAME padding along H).
        zrow = jnp.zeros((1, WC), rows.dtype)
        up = jnp.concatenate([zrow, rows[:H - 1, :]], axis=0)
        down = jnp.concatenate([rows[1:, :], zrow], axis=0)
        return jnp.concatenate([up, rows, down], axis=-1)

    # ---- conv1 (3x3, s=1, p=1) as ONE MXU matmul + folded BN1 + ReLU ----
    acc1 = jnp.dot(row_patch(x32).astype(cdt), w1_ref[...],
                   preferred_element_type=jnp.float32)
    y = jnp.maximum(acc1 * s1_ref[...] + b1_ref[...], 0.0)

    # ---- conv2 (3x3, s=1, p=1) as ONE MXU matmul + folded BN2 ----
    acc2 = jnp.dot(row_patch(y).astype(cdt), w2_ref[...],
                   preferred_element_type=jnp.float32)
    z = acc2 * s2_ref[...] + b2_ref[...]

    # ---- identity residual + ReLU, lane-dense store ----
    out_ref[0] = jnp.maximum(z + x32, 0.0).astype(out_ref.dtype)


def build_band_weight(w_hwio, W):
    """(3, 3, Cin, Cout) HWIO conv weights -> (3*W*Cin, W*Cout) band matrix.

    Row index  = kh*W*Cin + w_in*Cin + cin   (kh in {0,1,2} = input row h+kh-1)
    Col index  = w_out*Cout + cout
    Entry      = w[kh, w_in - w_out + 1, cin, cout] if |w_in - w_out| <= 1 else 0
    The zero band structure implements SAME padding along W.
    """
    C = w_hwio.shape[2]
    w_in = jnp.arange(W)[:, None]
    w_out = jnp.arange(W)[None, :]
    kw = w_in - w_out + 1                               # (W, W)
    valid = (kw >= 0) & (kw <= 2)
    kw_c = jnp.clip(kw, 0, 2)
    m = w_hwio[:, kw_c, :, :]                           # (3, Win, Wout, Ci, Co)
    m = jnp.where(valid[None, :, :, None, None], m, 0.0)
    m = jnp.transpose(m, (0, 1, 3, 2, 4))               # (3, Win, Ci, Wout, Co)
    return m.reshape(3 * W * C, W * C)


@functools.partial(jax.jit, static_argnames=("compute_dtype",))
def baseblock_forward_nhwc(x_nhwc, w1, s1, b1, w2, s2, b2,
                           compute_dtype=jnp.float32):
    """x_nhwc: (N, H, W, C) — fast path, no HBM transposes."""
    N, H, W, C = x_nhwc.shape
    assert w1.shape == (3, 3, C, C) and w2.shape == (3, 3, C, C), \
        "identity residual requires input_planes == planes (dim_change=None)"
    WC = W * C

    x2d = x_nhwc.reshape(N, H, WC).astype(jnp.float32)   # free metadata reshape

    w1m = build_band_weight(w1.astype(jnp.float32), W).astype(compute_dtype)
    w2m = build_band_weight(w2.astype(jnp.float32), W).astype(compute_dtype)
    s1l = jnp.tile(s1.astype(jnp.float32), W).reshape(1, WC)
    b1l = jnp.tile(b1.astype(jnp.float32), W).reshape(1, WC)
    s2l = jnp.tile(s2.astype(jnp.float32), W).reshape(1, WC)
    b2l = jnp.tile(b2.astype(jnp.float32), W).reshape(1, WC)

    out2d = pl.pallas_call(
        baseblock_kernel,
        out_shape=jax.ShapeDtypeStruct((N, H, WC), x_nhwc.dtype),
        grid_spec=pltpu.PrefetchScalarGridSpec(
            num_scalar_prefetch=0,
            grid=(N,),
            in_specs=[
                pl.BlockSpec((1, H, WC), lambda n: (n, 0, 0)),
                pl.BlockSpec((3 * WC, WC), lambda n: (0, 0)),
                pl.BlockSpec((1, WC), lambda n: (0, 0)),
                pl.BlockSpec((1, WC), lambda n: (0, 0)),
                pl.BlockSpec((3 * WC, WC), lambda n: (0, 0)),
                pl.BlockSpec((1, WC), lambda n: (0, 0)),
                pl.BlockSpec((1, WC), lambda n: (0, 0)),
            ],
            out_specs=pl.BlockSpec((1, H, WC), lambda n: (n, 0, 0)),
        ),
        compiler_params=pltpu.CompilerParams(
            dimension_semantics=("parallel",)),
    )(x2d, w1m, s1l, b1l, w2m, s2l, b2l)

    return out2d.reshape(N, H, W, C)


@functools.partial(jax.jit, static_argnames=("compute_dtype",))
def baseblock_forward(x_nchw, w1, s1, b1, w2, s2, b2,
                      compute_dtype=jnp.float32):
    """PyTorch-style NCHW wrapper around the NHWC fast path."""
    x = jnp.transpose(x_nchw, (0, 2, 3, 1))
    out = baseblock_forward_nhwc(x, w1, s1, b1, w2, s2, b2,
                                 compute_dtype=compute_dtype)
    return jnp.transpose(out, (0, 3, 1, 2))


def fold_bn(gamma, beta, mean, var, conv_bias, eps=1e-5):
    scale = gamma / jnp.sqrt(var + eps)
    bias = beta + (conv_bias - mean) * scale
    return scale, bias


def ref_forward(x_nchw, w1_hwio, bc1, g1, be1, m1, v1,
                w2_hwio, bc2, g2, be2, m2, v2, eps=1e-5):
    """Pure-JAX reference (eval-mode BN), NHWC internally."""
    x = jnp.transpose(x_nchw, (0, 2, 3, 1))
    dn = ('NHWC', 'HWIO', 'NHWC')
    y = lax.conv_general_dilated(x, w1_hwio, (1, 1), 'SAME',
                                 dimension_numbers=dn) + bc1
    y = (y - m1) / jnp.sqrt(v1 + eps) * g1 + be1
    y = jnp.maximum(y, 0.0)
    z = lax.conv_general_dilated(y, w2_hwio, (1, 1), 'SAME',
                                 dimension_numbers=dn) + bc2
    z = (z - m2) / jnp.sqrt(v2 + eps) * g2 + be2
    out = jnp.maximum(z + x, 0.0)
    return jnp.transpose(out, (0, 3, 1, 2))


if __name__ == "__main__":
    # batch=2, channels=8, spatial=16x16  ->  W*C = 128 (fully lane-dense)
    N, C, H, W = 2, 8, 16, 16
    key = jax.random.PRNGKey(0)
    keys = jax.random.split(key, 13)

    x = jax.random.normal(keys[0], (N, C, H, W), jnp.float32)

    # conv weights generated directly in HWIO; biases per out-channel
    w1 = 0.1 * jax.random.normal(keys[1], (3, 3, C, C), jnp.float32)
    bconv1 = 0.1 * jax.random.normal(keys[2], (C,), jnp.float32)
    w2 = 0.1 * jax.random.normal(keys[3], (3, 3, C, C), jnp.float32)
    bconv2 = 0.1 * jax.random.normal(keys[4], (C,), jnp.float32)

    # BN params (eval mode: running stats)
    g1 = 1.0 + 0.1 * jax.random.normal(keys[5], (C,), jnp.float32)
    be1 = 0.1 * jax.random.normal(keys[6], (C,), jnp.float32)
    m1 = 0.1 * jax.random.normal(keys[7], (C,), jnp.float32)
    v1 = jnp.abs(jax.random.normal(keys[8], (C,), jnp.float32)) + 0.5
    g2 = 1.0 + 0.1 * jax.random.normal(keys[9], (C,), jnp.float32)
    be2 = 0.1 * jax.random.normal(keys[10], (C,), jnp.float32)
    m2 = 0.1 * jax.random.normal(keys[11], (C,), jnp.float32)
    v2 = jnp.abs(jax.random.normal(keys[12], (C,), jnp.float32)) + 0.5

    s1, b1 = fold_bn(g1, be1, m1, v1, bconv1)
    s2, b2 = fold_bn(g2, be2, m2, v2, bconv2)

    ref = jax.block_until_ready(ref_forward(x, w1, bconv1, g1, be1, m1, v1,
                                            w2, bconv2, g2, be2, m2, v2))

    # f32 MXU-input path (tight correctness check)
    out = jax.block_until_ready(
        baseblock_forward(x, w1, s1, b1, w2, s2, b2,
                          compute_dtype=jnp.float32))
    assert out.shape == (N, C, H, W)
    err32 = float(jnp.max(jnp.abs(out - ref)))
    assert err32 < 5e-4, err32

    # bf16 MXU-input path (f32 accumulation + f32 epilogue), looser tolerance
    out_bf = jax.block_until_ready(
        baseblock_forward(x, w1, s1, b1, w2, s2, b2,
                          compute_dtype=jnp.bfloat16))
    errbf = float(jnp.max(jnp.abs(out_bf - ref)))
    assert errbf < 1e-1, errbf

    print("KERNEL_OK")
</pallas_src>

<mosaic_0001>
module attributes {stable_mosaic.version = 11 : i64} {
  func.func @baseblock_kernel(%arg0: i32, %arg1: memref<1x16x128xf32, #tpu.memory_space<vmem>>, %arg2: memref<384x128xf32, #tpu.memory_space<vmem>>, %arg3: memref<1x128xf32, #tpu.memory_space<vmem>>, %arg4: memref<1x128xf32, #tpu.memory_space<vmem>>, %arg5: memref<384x128xf32, #tpu.memory_space<vmem>>, %arg6: memref<1x128xf32, #tpu.memory_space<vmem>>, %arg7: memref<1x128xf32, #tpu.memory_space<vmem>>, %arg8: memref<1x16x128xf32, #tpu.memory_space<vmem>>) attributes {dimension_semantics = [#tpu.dimension_semantics<parallel>], iteration_bounds = array<i64: 2>, scalar_prefetch = 0 : i64, scratch_operands = 0 : i64, tpu.core_type = #tpu.core_type<tc>, window_params = [{transform_indices = @transform_0, window_bounds = array<i64: 1, 16, 128>}, {pipeline_mode = #tpu.pipeline_mode<synchronous>, transform_indices = @transform_1, window_bounds = array<i64: 384, 128>}, {pipeline_mode = #tpu.pipeline_mode<synchronous>, transform_indices = @transform_2, window_bounds = array<i64: 1, 128>}, {pipeline_mode = #tpu.pipeline_mode<synchronous>, transform_indices = @transform_3, window_bounds = array<i64: 1, 128>}, {pipeline_mode = #tpu.pipeline_mode<synchronous>, transform_indices = @transform_4, window_bounds = array<i64: 384, 128>}, {pipeline_mode = #tpu.pipeline_mode<synchronous>, transform_indices = @transform_5, window_bounds = array<i64: 1, 128>}, {pipeline_mode = #tpu.pipeline_mode<synchronous>, transform_indices = @transform_6, window_bounds = array<i64: 1, 128>}, {transform_indices = @transform_7, window_bounds = array<i64: 1, 16, 128>}]} {
    %c0 = arith.constant 0 : index
    %c0_0 = arith.constant 0 : index
    %c0_1 = arith.constant 0 : index
    %0 = vector.load %arg1[%c0, %c0_0, %c0_1] : memref<1x16x128xf32, #tpu.memory_space<vmem>>, vector<1x16x128xf32>
    %1 = vector.shape_cast %0 : vector<1x16x128xf32> to vector<16x128xf32>
    %cst = arith.constant 0.000000e+00 : f32
    %2 = vector.broadcast %cst : f32 to vector<1x128xf32>
    %3 = vector.extract_strided_slice %1 {offsets = [0, 0], sizes = [15, 128], strides = [1, 1]} : vector<16x128xf32> to vector<15x128xf32>
    %4 = tpu.concatenate %2, %3 in 0 : vector<1x128xf32>, vector<15x128xf32> -> vector<16x128xf32>
    %5 = vector.extract_strided_slice %1 {offsets = [1, 0], sizes = [15, 128], strides = [1, 1]} : vector<16x128xf32> to vector<15x128xf32>
    %6 = tpu.concatenate %5, %2 in 0 : vector<15x128xf32>, vector<1x128xf32> -> vector<16x128xf32>
    %7 = tpu.concatenate %4, %1, %6 in 1 : vector<16x128xf32>, vector<16x128xf32>, vector<16x128xf32> -> vector<16x384xf32>
    %c0_2 = arith.constant 0 : index
    %c0_3 = arith.constant 0 : index
    %8 = vector.load %arg2[%c0_2, %c0_3] : memref<384x128xf32, #tpu.memory_space<vmem>>, vector<384x128xf32>
    %cst_4 = arith.constant dense<0.000000e+00> : vector<16x128xf32>
    %9 = tpu.matmul %7, %8, %cst_4 {dimension_numbers = #tpu.dot_dimension_numbers<[1], [0], [0], [1], [0, 0, 1, 1], [], []>} : vector<16x384xf32>, vector<384x128xf32>, vector<16x128xf32> -> vector<16x128xf32>
    %c0_5 = arith.constant 0 : index
    %c0_6 = arith.constant 0 : index
    %10 = vector.load %arg3[%c0_5, %c0_6] : memref<1x128xf32, #tpu.memory_space<vmem>>, vector<1x128xf32>
    %11 = vector.broadcast %10 : vector<1x128xf32> to vector<16x128xf32>
    %12 = arith.mulf %9, %11 : vector<16x128xf32>
    %c0_7 = arith.constant 0 : index
    %c0_8 = arith.constant 0 : index
    %13 = vector.load %arg4[%c0_7, %c0_8] : memref<1x128xf32, #tpu.memory_space<vmem>>, vector<1x128xf32>
    %14 = vector.broadcast %13 : vector<1x128xf32> to vector<16x128xf32>
    %15 = arith.addf %12, %14 : vector<16x128xf32>
    %cst_9 = arith.constant 0.000000e+00 : f32
    %16 = vector.broadcast %cst_9 : f32 to vector<16x128xf32>
    %17 = arith.maximumf %15, %16 : vector<16x128xf32>
    %cst_10 = arith.constant 0.000000e+00 : f32
    %18 = vector.broadcast %cst_10 : f32 to vector<1x128xf32>
    %19 = vector.extract_strided_slice %17 {offsets = [0, 0], sizes = [15, 128], strides = [1, 1]} : vector<16x128xf32> to vector<15x128xf32>
    %20 = tpu.concatenate %18, %19 in 0 : vector<1x128xf32>, vector<15x128xf32> -> vector<16x128xf32>
    %21 = vector.extract_strided_slice %17 {offsets = [1, 0], sizes = [15, 128], strides = [1, 1]} : vector<16x128xf32> to vector<15x128xf32>
    %22 = tpu.concatenate %21, %18 in 0 : vector<15x128xf32>, vector<1x128xf32> -> vector<16x128xf32>
    %23 = tpu.concatenate %20, %17, %22 in 1 : vector<16x128xf32>, vector<16x128xf32>, vector<16x128xf32> -> vector<16x384xf32>
    %c0_11 = arith.constant 0 : index
    %c0_12 = arith.constant 0 : index
    %24 = vector.load %arg5[%c0_11, %c0_12] : memref<384x128xf32, #tpu.memory_space<vmem>>, vector<384x128xf32>
    %cst_13 = arith.constant dense<0.000000e+00> : vector<16x128xf32>
    %25 = tpu.matmul %23, %24, %cst_13 {dimension_numbers = #tpu.dot_dimension_numbers<[1], [0], [0], [1], [0, 0, 1, 1], [], []>} : vector<16x384xf32>, vector<384x128xf32>, vector<16x128xf32> -> vector<16x128xf32>
    %c0_14 = arith.constant 0 : index
    %c0_15 = arith.constant 0 : index
    %26 = vector.load %arg6[%c0_14, %c0_15] : memref<1x128xf32, #tpu.memory_space<vmem>>, vector<1x128xf32>
    %27 = vector.broadcast %26 : vector<1x128xf32> to vector<16x128xf32>
    %28 = arith.mulf %25, %27 : vector<16x128xf32>
    %c0_16 = arith.constant 0 : index
    %c0_17 = arith.constant 0 : index
    %29 = vector.load %arg7[%c0_16, %c0_17] : memref<1x128xf32, #tpu.memory_space<vmem>>, vector<1x128xf32>
    %30 = vector.broadcast %29 : vector<1x128xf32> to vector<16x128xf32>
    %31 = arith.addf %28, %30 : vector<16x128xf32>
    %32 = arith.addf %31, %1 : vector<16x128xf32>
    %cst_18 = arith.constant 0.000000e+00 : f32
    %33 = vector.broadcast %cst_18 : f32 to vector<16x128xf32>
    %34 = arith.maximumf %32, %33 : vector<16x128xf32>
    %c0_19 = arith.constant 0 : index
    %c0_20 = arith.constant 0 : index
    %c0_21 = arith.constant 0 : index
    %35 = vector.load %arg8[%c0_19, %c0_20, %c0_21] : memref<1x16x128xf32, #tpu.memory_space<vmem>>, vector<1x16x128xf32>
    %36 = vector.shape_cast %35 : vector<1x16x128xf32> to vector<16x128xf32>
    %37 = vector.shape_cast %34 : vector<16x128xf32> to vector<1x16x128xf32>
    tpu.vector_store %arg8[%c0_19, %c0_20, %c0_21], %37 {strides = array<i32>} : memref<1x16x128xf32, #tpu.memory_space<vmem>>, vector<1x16x128xf32>,
    return
  }
  func.func @transform_0(%arg0: i32) -> (i32, i32, i32) {
    %c0_i32 = arith.constant 0 : i32
    %c0_i32_0 = arith.constant 0 : i32
    %c0_i32_1 = arith.constant 0 : i32
    return %arg0, %c0_i32, %c0_i32_0 : i32, i32, i32
  }
  func.func @transform_1(%arg0: i32) -> (i32, i32) {
    %c0_i32 = arith.constant 0 : i32
    %c0_i32_0 = arith.constant 0 : i32
    %c0_i32_1 = arith.constant 0 : i32
    return %c0_i32, %c0_i32_0 : i32, i32
  }
  func.func @transform_2(%arg0: i32) -> (i32, i32) {
    %c0_i32 = arith.constant 0 : i32
    %c0_i32_0 = arith.constant 0 : i32
    %c0_i32_1 = arith.constant 0 : i32
    return %c0_i32, %c0_i32_0 : i32, i32
  }
  func.func @transform_3(%arg0: i32) -> (i32, i32) {
    %c0_i32 = arith.constant 0 : i32
    %c0_i32_0 = arith.constant 0 : i32
    %c0_i32_1 = arith.constant 0 : i32
    return %c0_i32, %c0_i32_0 : i32, i32
  }
  func.func @transform_4(%arg0: i32) -> (i32, i32) {
    %c0_i32 = arith.constant 0 : i32
    %c0_i32_0 = arith.constant 0 : i32
    %c0_i32_1 = arith.constant 0 : i32
    return %c0_i32, %c0_i32_0 : i32, i32
  }
  func.func @transform_5(%arg0: i32) -> (i32, i32) {
    %c0_i32 = arith.constant 0 : i32
    %c0_i32_0 = arith.constant 0 : i32
    %c0_i32_1 = arith.constant 0 : i32
    return %c0_i32, %c0_i32_0 : i32, i32
  }
  func.func @transform_6(%arg0: i32) -> (i32, i32) {
    %c0_i32 = arith.constant 0 : i32
    %c0_i32_0 = arith.constant 0 : i32
    %c0_i32_1 = arith.constant 0 : i32
    return %c0_i32, %c0_i32_0 : i32, i32
  }
  func.func @transform_7(%arg0: i32) -> (i32, i32, i32) {
    %c0_i32 = arith.constant 0 : i32
    %c0_i32_0 = arith.constant 0 : i32
    %c0_i32_1 = arith.constant 0 : i32
    return %arg0, %c0_i32, %c0_i32_0 : i32, i32, i32
  }
}

</mosaic_0001>

<llo_original>
// kernel: tile.23
$region0: #{tile.23}
  #allocation0 [shape = 's32[1]{0}', space=sflag, size = 0x4, scoped, tag = 'scoped memory for tile.23']
  %s0 = inlined_call_operand.vmem [shape: f32[8], index: 0, kind: input, shape index: {}]
  %s1 = inlined_call_operand.vmem [shape: f32[16,8], index: 1, kind: output, shape index: {}]
  // Predicated region
  $region2: #{tile.23} parent=0 // pred_check
    _
  $region3: #{tile.23} parent=0 // pred_check_branch
    %3 = sbr.rel (0) target = $region5
  $region4: #{tile.23} parent=0 // pred_region
    _
  $region5: #{tile.23} parent=0 // pred_fallthru
    _
  %v4 = vld [vmem:[%s0] ss:$0 sm:$0xff]
  %5 = vst [vmem:[%s1] sm:$0xff] %v4
  %s6 = scalar_lea.vmem %s1, 8
  %7 = vst [vmem:[%s6] sm:$0xff] %v4

// kernel: tile.24
$region0: #{tile.24}
  %s0 = inlined_call_operand.vmem [shape: f32[16,8], index: 0, kind: input, shape index: {}]
  %s1 = inlined_call_operand.vmem [shape: f32[1,128], index: 1, kind: output, shape index: {}]
  $region1: #{tile.24} parent=0
    #allocation0 [shape = 'u8[4096]{0}', space=vmem, size = 0x1000, scoped, tag = 'scoped mem for output reshape']
    %v2 = vld [vmem:[%s0] sm:$0x1]
    %vm3 = vcmask 64512
    %4 = vst.msk [vmem:[#allocation0] sm:$0x1] %vm3, %v2
    %s5 = scalar_lea.vmem %s0, 15
    %v6 = vld [vmem:[%s5] sm:$0x1]
    %7 = vrot.lane.b32.xlu0 %v6, 120
    %v8 = vpop.permute.xlu0 %7
    %vm9 = vcmask 1048512
    %10 = vst.msk [vmem:[#allocation0] sm:$0x1] %vm9, %v8
    %s11 = scalar_lea.vmem %s0, 14
    %v12 = vld [vmem:[%s11] sm:$0x1]
    %13 = vrot.lane.b32.xlu0 %v12, 112
    %v14 = vpop.permute.xlu0 %13
    %vm15 = vcmask 982912
    %16 = vst.msk [vmem:[#allocation0] sm:$0x1] %vm15, %v14
    %s17 = scalar_lea.vmem %s0, 13
    %v18 = vld [vmem:[%s17] sm:$0x1]
    %19 = vrot.lane.b32.xlu0 %v18, 104
    %v20 = vpop.permute.xlu0 %19
    %vm21 = vcmask 917312
    %22 = vst.msk [vmem:[#allocation0] sm:$0x1] %vm21, %v20
    %s23 = scalar_lea.vmem %s0, 12
    %v24 = vld [vmem:[%s23] sm:$0x1]
    %25 = vrot.lane.b32.xlu0 %v24, 96
    %v26 = vpop.permute.xlu0 %25
    %vm27 = vcmask 851712
    %28 = vst.msk [vmem:[#allocation0] sm:$0x1] %vm27, %v26
    %s29 = scalar_lea.vmem %s0, 11
    %v30 = vld [vmem:[%s29] sm:$0x1]
    %31 = vrot.lane.b32.xlu0 %v30, 88
    %v32 = vpop.permute.xlu0 %31
    %vm33 = vcmask 786112
    %34 = vst.msk [vmem:[#allocation0] sm:$0x1] %vm33, %v32
    %s35 = scalar_lea.vmem %s0, 10
    %v36 = vld [vmem:[%s35] sm:$0x1]
    %37 = vrot.lane.b32.xlu0 %v36, 80
    %v38 = vpop.permute.xlu0 %37
    %vm39 = vcmask 720512
    %40 = vst.msk [vmem:[#allocation0] sm:$0x1] %vm39, %v38
    %s41 = scalar_lea.vmem %s0, 9
    %v42 = vld [vmem:[%s41] sm:$0x1]
    %43 = vrot.lane.b32.xlu0 %v42, 72
    %v44 = vpop.permute.xlu0 %43
    %vm45 = vcmask 654912
    %46 = vst.msk [vmem:[#allocation0] sm:$0x1] %vm45, %v44
    %s47 = scalar_lea.vmem %s0, 8
    %v48 = vld [vmem:[%s47] sm:$0x1]
    %49 = vrot.lane.b32.xlu0 %v48, 64
    %v50 = vpop.permute.xlu0 %49
    %vm51 = vcmask 589312
    %52 = vst.msk [vmem:[#allocation0] sm:$0x1] %vm51, %v50
    %s53 = scalar_lea.vmem %s0, 7
    %v54 = vld [vmem:[%s53] sm:$0x1]
    %55 = vrot.lane.b32.xlu0 %v54, 56
    %v56 = vpop.permute.xlu0 %55
    %vm57 = vcmask 523712
    %58 = vst.msk [vmem:[#allocation0] sm:$0x1] %vm57, %v56
    %s59 = scalar_lea.vmem %s0, 6
    %v60 = vld [vmem:[%s59] sm:$0x1]
    %61 = vrot.lane.b32.xlu0 %v60, 48
    %v62 = vpop.permute.xlu0 %61
    %vm63 = vcmask 458112
    %64 = vst.msk [vmem:[#allocation0] sm:$0x1] %vm63, %v62
    %s65 = scalar_lea.vmem %s0, 5
    %v66 = vld [vmem:[%s65] sm:$0x1]
    %67 = vrot.lane.b32.xlu0 %v66, 40
    %v68 = vpop.permute.xlu0 %67
    %vm69 = vcmask 392512
    %70 = vst.msk [vmem:[#allocation0] sm:$0x1] %vm69, %v68
    %s71 = scalar_lea.vmem %s0, 4
    %v72 = vld [vmem:[%s71] sm:$0x1]
    %73 = vrot.lane.b32.xlu0 %v72, 32
    %v74 = vpop.permute.xlu0 %73
    %vm75 = vcmask 326912
    %76 = vst.msk [vmem:[#allocation0] sm:$0x1] %vm75, %v74
    %s77 = scalar_lea.vmem %s0, 3
    %v78 = vld [vmem:[%s77] sm:$0x1]
    %79 = vrot.lane.b32.xlu0 %v78, 24
    %v80 = vpop.permute.xlu0 %79
    %vm81 = vcmask 261312
    %82 = vst.msk [vmem:[#allocation0] sm:$0x1] %vm81, %v80
    %s83 = scalar_lea.vmem %s0, 2
    %v84 = vld [vmem:[%s83] sm:$0x1]
    %85 = vrot.lane.b32.xlu0 %v84, 16
    %v86 = vpop.permute.xlu0 %85
    %vm87 = vcmask 195712
    %88 = vst.msk [vmem:[#allocation0] sm:$0x1] %vm87, %v86
    %s89 = scalar_lea.vmem %s0, 1
    %v90 = vld [vmem:[%s89] sm:$0x1]
    %91 = vrot.lane.b32.xlu0 %v90, 8
    %v92 = vpop.permute.xlu0 %91
    %vm93 = vcmask 130112
    %94 = vst.msk [vmem:[#allocation0] sm:$0x1] %vm93, %v92
    %s96 = sshllo.u32 0, 1
    %v98 = vld [vmem:[#allocation0] sm:%s96]
    %s99 = sshllo.u32 0, 1
    %100 = vst [vmem:[%s1] sm:%s99] %v98

// kernel: baseblock_forward_nhwc.1
$region0: #{baseblock_forward_nhwc.1}
  #allocation0 [shape = 'u32[]', space=smem, size = 0x4, offset = 0x4, fixed_abs, tag = 'smem constant byte address 0x4 - core index']
  #allocation1 [shape = 'u32[144,128]{1,0:T(1,128)}', space=vmem, size = 0x12000, scoped, tag = 'internal scratch']
  %s0 = inlined_call_operand.vmem [shape: f32[2,16,128], index: 0, kind: input, shape index: {}]
  %s1 = inlined_call_operand.vmem [shape: f32[384,128], index: 1, kind: input, shape index: {}]
  %s2 = inlined_call_operand.vmem [shape: f32[1,128], index: 2, kind: input, shape index: {}]
  %s3 = inlined_call_operand.vmem [shape: f32[1,128], index: 3, kind: input, shape index: {}]
  %s4 = inlined_call_operand.vmem [shape: f32[384,128], index: 4, kind: input, shape index: {}]
  %s5 = inlined_call_operand.vmem [shape: f32[1,128], index: 5, kind: input, shape index: {}]
  %s6 = inlined_call_operand.vmem [shape: f32[1,128], index: 6, kind: input, shape index: {}]
  %s7 = inlined_call_operand.vmem [shape: f32[2,16,128], index: 7, kind: output, shape index: {}]
  %s8 = sld [smem:[#allocation0]]
  $region61: #{baseblock_forward_nhwc.1} parent=0
    _
  %s10 = ssub.s32 1, %s8
  %s11 = scalar_select 0, %s10, %s8
  loop: start=0, step=1, limit=4
  $region2: #{baseblock_forward_nhwc.1} parent=0 // loop_pre_header
    _
  $region3: #{baseblock_forward_nhwc.1} parent=0 // loop_header
    %s13 = sphi 0, %s17
    %p14 = scmp.ge.s32.totalorder %s13, 4
    %s23 = sphi 0, %s25
    %s26 = sphi 0, %s23
    %s27 = sphi 0, %s26
    %s43 = sphi 0, %s27
    %s47 = sphi 0, %s47
    %s49 = sphi 0, %s47
    %s50 = sphi 0, %s49
    %s64 = sphi 0, %s50
    %s68 = sphi 0, %s68
    %s70 = sphi 0, %s68
    %s71 = sphi 0, %s70
    %s85 = sphi 0, %s71
    %s89 = sphi 0, %s89
    %s91 = sphi 0, %s89
    %s92 = sphi 0, %s91
    %s106 = sphi 0, %s92
    %s110 = sphi 0, %s110
    %s112 = sphi 0, %s110
    %s113 = sphi 0, %s112
    %s127 = sphi 0, %s113
    %s131 = sphi 0, %s131
    %s133 = sphi 0, %s131
    %s134 = sphi 0, %s133
    %s148 = sphi 0, %s134
    %s152 = sphi 0, %s152
    %s154 = sphi 0, %s152
    %s155 = sphi 0, %s154
    %s169 = sphi 0, %s155
    %s175 = sphi 0, %s177
    %s178 = sphi 0, %s175
    %s179 = sphi 0, %s178
    %s195 = sphi 0, %s179
  $region4: #{baseblock_forward_nhwc.1} parent=0 // loop_header_branch
    %16 = sbr.rel (%p14) target = $region8
  $region5: #{baseblock_forward_nhwc.1} parent=0 // loop_body
    %s18 = ssub.s32 %s13, 1
    %s19 = ssub.s32 %s13, 2
    %s20 = sadd.s32 %s13, 1
    %s21 = ssub.s32 %s13, %s20
    %p22 = scmp.eq.s32.totalorder %s21, 0
    %s24 = sadd.s32 %s23, 1
    %s25 = scalar_select %p22, %s23, %s24
    %p28 = pneg %p22
    %p29 = scmp.eq.s32.totalorder %s13, 1
    %p30 = por %p28, %p29
    %p31 = scmp.ne.s32.totalorder %s23, %s26
    %p32 = scmp.eq.s32.totalorder %s13, 0
    %p33 = por %p31, %p32
    %p34 = scmp.ne.s32.totalorder %s23, %s26
    %p35 = scmp.eq.s32.totalorder %s18, 1
    %p36 = por %p34, %p35
    %p37 = scmp.ne.s32.totalorder %s26, %s27
    %p38 = scmp.eq.s32.totalorder %s18, 0
    %p39 = por %p37, %p38
    %p40 = scmp.ne.s32.totalorder %s26, %s27
    %p41 = scmp.eq.s32.totalorder %s19, 1
    %p42 = por %p40, %p41
    %p44 = scmp.ne.s32.totalorder %s27, %s43
    %p45 = scmp.eq.s32.totalorder %s19, 0
    %p46 = por %p44, %p45
    %s48 = sadd.s32 %s47, 1
    %p51 = scmp.eq.s32.totalorder %s13, 1
    %p52 = scmp.ne.s32.totalorder %s47, %s49
    %p53 = scmp.eq.s32.totalorder %s13, 0
    %p54 = por %p52, %p53
    %p55 = scmp.ne.s32.totalorder %s47, %s49
    %p56 = scmp.eq.s32.totalorder %s18, 1
    %p57 = por %p55, %p56
    %p58 = scmp.ne.s32.totalorder %s49, %s50
    %p59 = scmp.eq.s32.totalorder %s18, 0
    %p60 = por %p58, %p59
    %p61 = scmp.ne.s32.totalorder %s49, %s50
    %p62 = scmp.eq.s32.totalorder %s19, 1
    %p63 = por %p61, %p62
    %p65 = scmp.ne.s32.totalorder %s50, %s64
    %p66 = scmp.eq.s32.totalorder %s19, 0
    %p67 = por %p65, %p66
    %s69 = sadd.s32 %s68, 1
    %p72 = scmp.eq.s32.totalorder %s13, 1
    %p73 = scmp.ne.s32.totalorder %s68, %s70
    %p74 = scmp.eq.s32.totalorder %s13, 0
    %p75 = por %p73, %p74
    %p76 = scmp.ne.s32.totalorder %s68, %s70
    %p77 = scmp.eq.s32.totalorder %s18, 1
    %p78 = por %p76, %p77
    %p79 = scmp.ne.s32.totalorder %s70, %s71
    %p80 = scmp.eq.s32.totalorder %s18, 0
    %p81 = por %p79, %p80
    %p82 = scmp.ne.s32.totalorder %s70, %s71
    %p83 = scmp.eq.s32.totalorder %s19, 1
    %p84 = por %p82, %p83
    %p86 = scmp.ne.s32.totalorder %s71, %s85
    %p87 = scmp.eq.s32.totalorder %s19, 0
    %p88 = por %p86, %p87
    %s90 = sadd.s32 %s89, 1
    %p93 = scmp.eq.s32.totalorder %s13, 1
    %p94 = scmp.ne.s32.totalorder %s89, %s91
    %p95 = scmp.eq.s32.totalorder %s13, 0
    %p96 = por %p94, %p95
    %p97 = scmp.ne.s32.totalorder %s89, %s91
    %p98 = scmp.eq.s32.totalorder %s18, 1
    %p99 = por %p97, %p98
    %p100 = scmp.ne.s32.totalorder %s91, %s92
    %p101 = scmp.eq.s32.totalorder %s18, 0
    %p102 = por %p100, %p101
    %p103 = scmp.ne.s32.totalorder %s91, %s92
    %p104 = scmp.eq.s32.totalorder %s19, 1
    %p105 = por %p103, %p104
    %p107 = scmp.ne.s32.totalorder %s92, %s106
    %p108 = scmp.eq.s32.totalorder %s19, 0
    %p109 = por %p107, %p108
    %s111 = sadd.s32 %s110, 1
    %p114 = scmp.eq.s32.totalorder %s13, 1
    %p115 = scmp.ne.s32.totalorder %s110, %s112
    %p116 = scmp.eq.s32.totalorder %s13, 0
    %p117 = por %p115, %p116
    %p118 = scmp.ne.s32.totalorder %s110, %s112
    %p119 = scmp.eq.s32.totalorder %s18, 1
    %p120 = por %p118, %p119
    %p121 = scmp.ne.s32.totalorder %s112, %s113
    %p122 = scmp.eq.s32.totalorder %s18, 0
    %p123 = por %p121, %p122
    %p124 = scmp.ne.s32.totalorder %s112, %s113
    %p125 = scmp.eq.s32.totalorder %s19, 1
    %p126 = por %p124, %p125
    %p128 = scmp.ne.s32.totalorder %s113, %s127
    %p129 = scmp.eq.s32.totalorder %s19, 0
    %p130 = por %p128, %p129
    %s132 = sadd.s32 %s131, 1
    %p135 = scmp.eq.s32.totalorder %s13, 1
    %p136 = scmp.ne.s32.totalorder %s131, %s133
    %p137 = scmp.eq.s32.totalorder %s13, 0
    %p138 = por %p136, %p137
    %p139 = scmp.ne.s32.totalorder %s131, %s133
    %p140 = scmp.eq.s32.totalorder %s18, 1
    %p141 = por %p139, %p140
    %p142 = scmp.ne.s32.totalorder %s133, %s134
    %p143 = scmp.eq.s32.totalorder %s18, 0
    %p144 = por %p142, %p143
    %p145 = scmp.ne.s32.totalorder %s133, %s134
    %p146 = scmp.eq.s32.totalorder %s19, 1
    %p147 = por %p145, %p146
    %p149 = scmp.ne.s32.totalorder %s134, %s148
    %p150 = scmp.eq.s32.totalorder %s19, 0
    %p151 = por %p149, %p150
    %s153 = sadd.s32 %s152, 1
    %p156 = scmp.eq.s32.totalorder %s13, 1
    %p157 = scmp.ne.s32.totalorder %s152, %s154
    %p158 = scmp.eq.s32.totalorder %s13, 0
    %p159 = por %p157, %p158
    %p160 = scmp.ne.s32.totalorder %s152, %s154
    %p161 = scmp.eq.s32.totalorder %s18, 1
    %p162 = por %p160, %p161
    %p163 = scmp.ne.s32.totalorder %s154, %s155
    %p164 = scmp.eq.s32.totalorder %s18, 0
    %p165 = por %p163, %p164
    %p166 = scmp.ne.s32.totalorder %s154, %s155
    %p167 = scmp.eq.s32.totalorder %s19, 1
    %p168 = por %p166, %p167
    %p170 = scmp.ne.s32.totalorder %s155, %s169
    %p171 = scmp.eq.s32.totalorder %s19, 0
    %p172 = por %p170, %p171
    %s173 = ssub.s32 %s13, %s20
    %p174 = scmp.eq.s32.totalorder %s173, 0
    %s176 = sadd.s32 %s175, 1
    %s177 = scalar_select %p174, %s175, %s176
    %p180 = pneg %p174
    %p181 = scmp.eq.s32.totalorder %s13, 1
    %p182 = por %p180, %p181
    %p183 = scmp.ne.s32.totalorder %s175, %s178
    %p184 = scmp.eq.s32.totalorder %s13, 0
    %p185 = por %p183, %p184
    %p186 = scmp.ne.s32.totalorder %s175, %s178
    %p187 = scmp.eq.s32.totalorder %s18, 1
    %p188 = por %p186, %p187
    %p189 = scmp.ne.s32.totalorder %s178, %s179
    %p190 = scmp.eq.s32.totalorder %s18, 0
    %p191 = por %p189, %p190
    %p192 = scmp.ne.s32.totalorder %s178, %s179
    %p193 = scmp.eq.s32.totalorder %s19, 1
    %p194 = por %p192, %p193
    %p196 = scmp.ne.s32.totalorder %s179, %s195
    %p197 = scmp.eq.s32.totalorder %s19, 0
    %p198 = por %p196, %p197
    %p199 = scmp.le.s32.totalorder 1, %s13
    %p200 = scmp.lt.s32.totalorder %s13, 3
    %p201 = pnand %p199, %p200
    %p202 = pneg %p201
    // Predicated region
    $region9: #{baseblock_forward_nhwc.1} parent=5 // pred_check
      _
    $region10: #{baseblock_forward_nhwc.1} parent=5 // pred_check_branch
      %204 = sbr.rel (%p201) target = $region12
    $region11: #{baseblock_forward_nhwc.1} parent=5 // pred_region
      %s205 = ssub.s32 %s13, 1
      // Predicated region
      $region13: #{baseblock_forward_nhwc.1} parent=11 // pred_check
        %p206 = pneg %p60
      $region14: #{baseblock_forward_nhwc.1} parent=11 // pred_check_branch
        %208 = sbr.rel (%p206) target = $region16
      $region15: #{baseblock_forward_nhwc.1} parent=11 // pred_region
        _
      $region16: #{baseblock_forward_nhwc.1} parent=11 // pred_fallthru
        _
      // Predicated region
      $region17: #{baseblock_forward_nhwc.1} parent=11 // pred_check
        %p209 = pneg %p81
      $region18: #{baseblock_forward_nhwc.1} parent=11 // pred_check_branch
        %211 = sbr.rel (%p209) target = $region20
      $region19: #{baseblock_forward_nhwc.1} parent=11 // pred_region
        _
      $region20: #{baseblock_forward_nhwc.1} parent=11 // pred_fallthru
        _
      // Predicated region
      $region21: #{baseblock_forward_nhwc.1} parent=11 // pred_check
        %p212 = pneg %p102
      $region22: #{baseblock_forward_nhwc.1} parent=11 // pred_check_branch
        %214 = sbr.rel (%p212) target = $region24
      $region23: #{baseblock_forward_nhwc.1} parent=11 // pred_region
        _
      $region24: #{baseblock_forward_nhwc.1} parent=11 // pred_fallthru
        _
      // Predicated region
      $region25: #{baseblock_forward_nhwc.1} parent=11 // pred_check
        %p215 = pneg %p123
      $region26: #{baseblock_forward_nhwc.1} parent=11 // pred_check_branch
        %217 = sbr.rel (%p215) target = $region28
      $region27: #{baseblock_forward_nhwc.1} parent=11 // pred_region
        _
      $region28: #{baseblock_forward_nhwc.1} parent=11 // pred_fallthru
        _
      // Predicated region
      $region29: #{baseblock_forward_nhwc.1} parent=11 // pred_check
        %p218 = pneg %p144
      $region30: #{baseblock_forward_nhwc.1} parent=11 // pred_check_branch
        %220 = sbr.rel (%p218) target = $region32
      $region31: #{baseblock_forward_nhwc.1} parent=11 // pred_region
        _
      $region32: #{baseblock_forward_nhwc.1} parent=11 // pred_fallthru
        _
      // Predicated region
      $region33: #{baseblock_forward_nhwc.1} parent=11 // pred_check
        %p221 = pneg %p165
      $region34: #{baseblock_forward_nhwc.1} parent=11 // pred_check_branch
        %223 = sbr.rel (%p221) target = $region36
      $region35: #{baseblock_forward_nhwc.1} parent=11 // pred_region
        _
      $region36: #{baseblock_forward_nhwc.1} parent=11 // pred_fallthru
        _
    $region12: #{baseblock_forward_nhwc.1} parent=5 // pred_fallthru
      _
    %p224 = scmp.lt.s32.totalorder %s13, 2
    // Predicated region
    $region37: #{baseblock_forward_nhwc.1} parent=5 // pred_check
      %p225 = pneg %p224
    $region38: #{baseblock_forward_nhwc.1} parent=5 // pred_check_branch
      %227 = sbr.rel (%p225) target = $region40
    $region39: #{baseblock_forward_nhwc.1} parent=5 // pred_region
      // Predicated region
      $region41: #{baseblock_forward_nhwc.1} parent=39 // pred_check
        %p228 = pneg %p33
      $region42: #{baseblock_forward_nhwc.1} parent=39 // pred_check_branch
        %230 = sbr.rel (%p228) target = $region44
      $region43: #{baseblock_forward_nhwc.1} parent=39 // pred_region
        %p231 = scmp.lt.s32.totalorder %s13, 1
        %s232 = scalar_select %p231, %s13, 1
        %s233 = smul.addr %s232, 2
        %s234 = smul.addr %s233, 8
        %s235 = scalar_lea.vmem %s0, %s234
      $region44: #{baseblock_forward_nhwc.1} parent=39 // pred_fallthru
        _
    $region40: #{baseblock_forward_nhwc.1} parent=5 // pred_fallthru
      _
    %p236 = scmp.le.s32.totalorder 1, %s13
    %p237 = scmp.lt.s32.totalorder %s13, 3
    %p238 = pnand %p236, %p237
    %p239 = pneg %p238
    // Predicated region
    $region45: #{baseblock_forward_nhwc.1} parent=5 // pred_check
      _
    $region46: #{baseblock_forward_nhwc.1} parent=5 // pred_check_branch
      %241 = sbr.rel (%p238) target = $region48
    $region47: #{baseblock_forward_nhwc.1} parent=5 // pred_region
      %s242 = ssub.s32 %s13, 1
      %p243 = scmp.lt.s32.totalorder %s18, 1
      %s244 = scalar_select %p243, %s18, 1
      %s245 = smul.addr %s244, 2
      %s246 = smul.addr %s245, 8
      %s247 = scalar_lea.vmem %s0, %s246
      %p248 = pneg %p39
      %p249 = pneg %p36
      %p250 = pneg %p60
      %p251 = pneg %p57
      %p252 = pneg %p81
      %p253 = pneg %p78
      %p254 = pneg %p102
      %p255 = pneg %p99
      %p256 = pneg %p123
      %p257 = pneg %p120
      %p258 = pneg %p144
      %p259 = pneg %p141
      %p260 = pneg %p165
      %p261 = pneg %p162
      %p262 = pneg %p191
      %p263 = pneg %p188
      %p264 = scmp.lt.s32.totalorder %s18, 1
      %s265 = scalar_select %p264, %s18, 1
      %s266 = smul.addr %s265, 2
      %s267 = smul.addr %s266, 8
      %s268 = scalar_lea.vmem %s7, %s267
      %p269 = scmp.lt.s32.totalorder %s18, 1
      %s270 = scalar_select %p269, %s18, 1
      %s271 = smul.addr %s270, 2
      %s272 = smul.addr %s271, 8
      %s273 = scalar_lea.vmem %s0, %s272
      %p274 = scmp.lt.s32.totalorder %s18, 1
      %s275 = scalar_select %p274, %s18, 1
      %s276 = smul.addr %s275, 2
      %s277 = smul.addr %s276, 8
      %s278 = scalar_lea.vmem %s7, %s277
      %v279 = vld [vmem:[%s273] sm:$0xff]
      %v280 = vld [vmem:[%s273 + $0x8] sm:$0xff]
      %vm283 = vcmask 1040384
      %v284 = vrot.slane %v279, 7
      %v285 = vrot.slane %v280, 7
      %v286 = vsel %vm283, %v284, %v285
      %v289 = vsel %vm283, 0.0, %v284
      %vm290 = vcmask 1046528
      %v291 = vrot.slane %v279, 1
      %v292 = vrot.slane %v280, 1
      %v293 = vsel %vm290, %v291, %v292
      %v296 = vsel %vm290, %v292, 0.0
      %v297 = vld [vmem:[%s1] sm:$0xff]
      %v298 = vld [vmem:[%s1 + $0x8] sm:$0xff]
      %v299 = vld [vmem:[%s1 + $0x10] sm:$0xff]
      %v300 = vld [vmem:[%s1 + $0x18] sm:$0xff]
      %v301 = vld [vmem:[%s1 + $0x20] sm:$0xff]
      %v302 = vld [vmem:[%s1 + $0x28] sm:$0xff]
      %v303 = vld [vmem:[%s1 + $0x30] sm:$0xff]
      %v304 = vld [vmem:[%s1 + $0x38] sm:$0xff]
      %v305 = vld [vmem:[%s1 + $0x40] sm:$0xff]
      %v306 = vld [vmem:[%s1 + $0x48] sm:$0xff]
      %v307 = vld [vmem:[%s1 + $0x50] sm:$0xff]
      %v308 = vld [vmem:[%s1 + $0x58] sm:$0xff]
      %v309 = vld [vmem:[%s1 + $0x60] sm:$0xff]
      %v310 = vld [vmem:[%s1 + $0x68] sm:$0xff]
      %v311 = vld [vmem:[%s1 + $0x70] sm:$0xff]
      %v312 = vld [vmem:[%s1 + $0x78] sm:$0xff]
      %v313 = vld [vmem:[%s1 + $0x80] sm:$0xff]
      %v314 = vld [vmem:[%s1 + $0x88] sm:$0xff]
      %v315 = vld [vmem:[%s1 + $0x90] sm:$0xff]
      %v316 = vld [vmem:[%s1 + $0x98] sm:$0xff]
      %v317 = vld [vmem:[%s1 + $0xa0] sm:$0xff]
      %v318 = vld [vmem:[%s1 + $0xa8] sm:$0xff]
      %v319 = vld [vmem:[%s1 + $0xb0] sm:$0xff]
      %v320 = vld [vmem:[%s1 + $0xb8] sm:$0xff]
      %v321 = vld [vmem:[%s1 + $0xc0] sm:$0xff]
      %v322 = vld [vmem:[%s1 + $0xc8] sm:$0xff]
      %v323 = vld [vmem:[%s1 + $0xd0] sm:$0xff]
      %v324 = vld [vmem:[%s1 + $0xd8] sm:$0xff]
      %v325 = vld [vmem:[%s1 + $0xe0] sm:$0xff]
      %v326 = vld [vmem:[%s1 + $0xe8] sm:$0xff]
      %v327 = vld [vmem:[%s1 + $0xf0] sm:$0xff]
      %v328 = vld [vmem:[%s1 + $0xf8] sm:$0xff]
      %v329 = vld [vmem:[%s1 + $0x100] sm:$0xff]
      %v330 = vld [vmem:[%s1 + $0x108] sm:$0xff]
      %v331 = vld [vmem:[%s1 + $0x110] sm:$0xff]
      %v332 = vld [vmem:[%s1 + $0x118] sm:$0xff]
      %v333 = vld [vmem:[%s1 + $0x120] sm:$0xff]
      %v334 = vld [vmem:[%s1 + $0x128] sm:$0xff]
      %v335 = vld [vmem:[%s1 + $0x130] sm:$0xff]
      %v336 = vld [vmem:[%s1 + $0x138] sm:$0xff]
      %v337 = vld [vmem:[%s1 + $0x140] sm:$0xff]
      %v338 = vld [vmem:[%s1 + $0x148] sm:$0xff]
      %v339 = vld [vmem:[%s1 + $0x150] sm:$0xff]
      %v340 = vld [vmem:[%s1 + $0x158] sm:$0xff]
      %v341 = vld [vmem:[%s1 + $0x160] sm:$0xff]
      %v342 = vld [vmem:[%s1 + $0x168] sm:$0xff]
      %v343 = vld [vmem:[%s1 + $0x170] sm:$0xff]
      %v344 = vld [vmem:[%s1 + $0x178] sm:$0xff]
      %345 = vmatprep.subr.mxu0 0.0
      %346 = vmatpush1.msra.mxu0 %v297
      %347 = vmatprep.subr.mxu0 0.0
      %348 = vmatpush1.msra.mxu0 %v298
      %349 = vmatprep.subr.mxu0 0.0
      %350 = vmatpush1.msra.mxu0 %v299
      %351 = vmatprep.subr.mxu0 0.0
      %352 = vmatpush1.msra.mxu0 %v300
      %353 = vmatprep.subr.mxu0 0.0
      %354 = vmatpush1.msra.mxu0 %v301
      %355 = vmatprep.subr.mxu0 0.0
      %356 = vmatpush1.msra.mxu0 %v302
      %357 = vmatprep.subr.mxu0 0.0
      %358 = vmatpush1.msra.mxu0 %v303
      %359 = vmatprep.subr.mxu0 0.0
      %360 = vmatpush1.msra.mxu0 %v304
      %361 = vmatprep.subr.mxu0 0.0
      %362 = vmatpush1.msra.mxu0 %v305
      %363 = vmatprep.subr.mxu0 0.0
      %364 = vmatpush1.msra.mxu0 %v306
      %365 = vmatprep.subr.mxu0 0.0
      %366 = vmatpush1.msra.mxu0 %v307
      %367 = vmatprep.subr.mxu0 0.0
      %368 = vmatpush1.msra.mxu0 %v308
      %369 = vmatprep.subr.mxu0 0.0
      %370 = vmatpush1.msra.mxu0 %v309
      %371 = vmatprep.subr.mxu0 0.0
      %372 = vmatpush1.msra.mxu0 %v310
      %373 = vmatprep.subr.mxu0 0.0
      %374 = vmatpush1.msra.mxu0 %v311
      %375 = vmatprep.subr.mxu0 0.0
      %376 = vmatpush1.msra.mxu0 %v312
      %377 = vmatprep.subr.mxu0 0.0
      %378 = vmatpush1.msra.mxu0 %v313
      %379 = vmatprep.subr.mxu0 0.0
      %380 = vmatpush1.msra.mxu0 %v314
      %381 = vmatprep.subr.mxu0 0.0
      %382 = vmatpush1.msra.mxu0 %v315
      %383 = vmatprep.subr.mxu0 0.0
      %384 = vmatpush1.msra.mxu0 %v316
      %385 = vmatprep.subr.mxu0 0.0
      %386 = vmatpush1.msra.mxu0 %v317
      %387 = vmatprep.subr.mxu0 0.0
      %388 = vmatpush1.msra.mxu0 %v318
      %389 = vmatprep.subr.mxu0 0.0
      %390 = vmatpush1.msra.mxu0 %v319
      %391 = vmatprep.subr.mxu0 0.0
      %392 = vmatpush1.msra.mxu0 %v320
      %393 = vmatprep.subr.mxu0 0.0
      %394 = vmatpush1.msra.mxu0 %v321
      %395 = vmatprep.subr.mxu0 0.0
      %396 = vmatpush1.msra.mxu0 %v322
      %397 = vmatprep.subr.mxu0 0.0
      %398 = vmatpush1.msra.mxu0 %v323
      %399 = vmatprep.subr.mxu0 0.0
      %400 = vmatpush1.msra.mxu0 %v324
      %401 = vmatprep.subr.mxu0 0.0
      %402 = vmatpush1.msra.mxu0 %v325
      %403 = vmatprep.subr.mxu0 0.0
      %404 = vmatpush1.msra.mxu0 %v326
      %405 = vmatprep.subr.mxu0 0.0
      %406 = vmatpush1.msra.mxu0 %v327
      %407 = vmatprep.subr.mxu0 0.0
      %408 = vmatpush1.msra.mxu0 %v328
      %409 = vmatprep.mubr.f32.mxu0 %v279
      %410 = vmatmul.mubr.f32.gmra.mrb[0].mxu0 %v289
      %v411 = vpop.f32.mrb[0].mxu0
      %v412 = vadd.f32 0.0, %v411
      %v413 = vpop.f32.mrb[0].mxu0
      %414 = vmatprep.mubr.f32.mxu0 %v280
      %415 = vmatmul.mubr.f32.gmra.mrb[0].mxu0 %v286
      %v416 = vpop.f32.mrb[0].mxu0
      %v417 = vadd.f32 0.0, %v416
      %v418 = vpop.f32.mrb[0].mxu0
      %419 = vdwg.mxu0
      %420 = vmatprep.subr.mxu0 0.0
      %421 = vmatpush1.msra.mxu0 %v329
      %422 = vmatprep.subr.mxu0 0.0
      %423 = vmatpush1.msra.mxu0 %v330
      %424 = vmatprep.subr.mxu0 0.0
      %425 = vmatpush1.msra.mxu0 %v331
      %426 = vmatprep.subr.mxu0 0.0
      %427 = vmatpush1.msra.mxu0 %v332
      %428 = vmatprep.subr.mxu0 0.0
      %429 = vmatpush1.msra.mxu0 %v333
      %430 = vmatprep.subr.mxu0 0.0
      %431 = vmatpush1.msra.mxu0 %v334
      %432 = vmatprep.subr.mxu0 0.0
      %433 = vmatpush1.msra.mxu0 %v335
      %434 = vmatprep.subr.mxu0 0.0
      %435 = vmatpush1.msra.mxu0 %v336
      %436 = vmatprep.subr.mxu0 0.0
      %437 = vmatpush1.msra.mxu0 %v337
      %438 = vmatprep.subr.mxu0 0.0
      %439 = vmatpush1.msra.mxu0 %v338
      %440 = vmatprep.subr.mxu0 0.0
      %441 = vmatpush1.msra.mxu0 %v339
      %442 = vmatprep.subr.mxu0 0.0
      %443 = vmatpush1.msra.mxu0 %v340
      %444 = vmatprep.subr.mxu0 0.0
      %445 = vmatpush1.msra.mxu0 %v341
      %446 = vmatprep.subr.mxu0 0.0
      %447 = vmatpush1.msra.mxu0 %v342
      %448 = vmatprep.subr.mxu0 0.0
      %449 = vmatpush1.msra.mxu0 %v343
      %450 = vmatprep.subr.mxu0 0.0
      %451 = vmatpush1.msra.mxu0 %v344
      %452 = vmatprep.subr.mxu0 0.0
      %453 = vmatpush1.msra.mxu0 0.0
      %454 = vmatprep.subr.mxu0 0.0
      %455 = vmatpush1.msra.mxu0 0.0
      %456 = vmatprep.subr.mxu0 0.0
      %457 = vmatpush1.msra.mxu0 0.0
      %458 = vmatprep.subr.mxu0 0.0
      %459 = vmatpush1.msra.mxu0 0.0
      %460 = vmatprep.subr.mxu0 0.0
      %461 = vmatpush1.msra.mxu0 0.0
      %462 = vmatprep.subr.mxu0 0.0
      %463 = vmatpush1.msra.mxu0 0.0
      %464 = vmatprep.subr.mxu0 0.0
      %465 = vmatpush1.msra.mxu0 0.0
      %466 = vmatprep.subr.mxu0 0.0
      %467 = vmatpush1.msra.mxu0 0.0
      %468 = vmatprep.subr.mxu0 0.0
      %469 = vmatpush1.msra.mxu0 0.0
      %470 = vmatprep.subr.mxu0 0.0
      %471 = vmatpush1.msra.mxu0 0.0
      %472 = vmatprep.subr.mxu0 0.0
      %473 = vmatpush1.msra.mxu0 0.0
      %474 = vmatprep.subr.mxu0 0.0
      %475 = vmatpush1.msra.mxu0 0.0
      %476 = vmatprep.subr.mxu0 0.0
      %477 = vmatpush1.msra.mxu0 0.0
      %478 = vmatprep.subr.mxu0 0.0
      %479 = vmatpush1.msra.mxu0 0.0
      %480 = vmatprep.subr.mxu0 0.0
      %481 = vmatpush1.msra.mxu0 0.0
      %482 = vmatprep.subr.mxu0 0.0
      %483 = vmatpush1.msra.mxu0 0.0
      %484 = vmatprep.mubr.f32.mxu0 0.0
      %485 = vmatmul.mubr.f32.gmra.mrb[0].mxu0 %v293
      %v486 = vpop.f32.mrb[0].mxu0
      %v487 = vadd.f32 %v412, %v486
      %v488 = vpop.f32.mrb[0].mxu0
      %489 = vmatprep.mubr.f32.mxu0 0.0
      %490 = vmatmul.mubr.f32.gmra.mrb[0].mxu0 %v296
      %v491 = vpop.f32.mrb[0].mxu0
      %v492 = vadd.f32 %v417, %v491
      %v493 = vpop.f32.mrb[0].mxu0
      %494 = vdwg.mxu0
      %v495 = vld [vmem:[%s2] sm:$0x1]
      %v497 = vlaneseq
      %v498 = vshrl.u32 %v497, 7
      %v499 = vsub.s32 0, %v498
      %v500 = vrot.slane %v495, %v499
      %v502 = vmul.f32 %v487, %v500
      %v503 = vmul.f32 %v492, %v500
      %v504 = vld [vmem:[%s3] sm:$0x1]
      %v506 = vlaneseq
      %v507 = vshrl.u32 %v506, 7
      %v508 = vsub.s32 0, %v507
      %v509 = vrot.slane %v504, %v508
      %v511 = vadd.f32 %v502, %v509
      %v512 = vadd.f32 %v503, %v509
      %v513 = vmax.f32 %v511, 0.0
      %v514 = vmax.f32 %v512, 0.0
      %v517 = vrot.slane %v513, 7
      %v518 = vrot.slane %v514, 7
      %v519 = vsel %vm283, %v517, %v518
      %v522 = vsel %vm283, 0.0, %v517
      %v523 = vrot.slane %v513, 1
      %v524 = vrot.slane %v514, 1
      %v525 = vsel %vm290, %v523, %v524
      %v528 = vsel %vm290, %v524, 0.0
      %v529 = vld [vmem:[%s4] sm:$0xff]
      %v530 = vld [vmem:[%s4 + $0x8] sm:$0xff]
      %v531 = vld [vmem:[%s4 + $0x10] sm:$0xff]
      %v532 = vld [vmem:[%s4 + $0x18] sm:$0xff]
      %v533 = vld [vmem:[%s4 + $0x20] sm:$0xff]
      %v534 = vld [vmem:[%s4 + $0x28] sm:$0xff]
      %v535 = vld [vmem:[%s4 + $0x30] sm:$0xff]
      %v536 = vld [vmem:[%s4 + $0x38] sm:$0xff]
      %v537 = vld [vmem:[%s4 + $0x40] sm:$0xff]
      %v538 = vld [vmem:[%s4 + $0x48] sm:$0xff]
      %v539 = vld [vmem:[%s4 + $0x50] sm:$0xff]
      %v540 = vld [vmem:[%s4 + $0x58] sm:$0xff]
      %v541 = vld [vmem:[%s4 + $0x60] sm:$0xff]
      %v542 = vld [vmem:[%s4 + $0x68] sm:$0xff]
      %v543 = vld [vmem:[%s4 + $0x70] sm:$0xff]
      %v544 = vld [vmem:[%s4 + $0x78] sm:$0xff]
      %v545 = vld [vmem:[%s4 + $0x80] sm:$0xff]
      %v546 = vld [vmem:[%s4 + $0x88] sm:$0xff]
      %v547 = vld [vmem:[%s4 + $0x90] sm:$0xff]
      %v548 = vld [vmem:[%s4 + $0x98] sm:$0xff]
      %v549 = vld [vmem:[%s4 + $0xa0] sm:$0xff]
      %v550 = vld [vmem:[%s4 + $0xa8] sm:$0xff]
      %v551 = vld [vmem:[%s4 + $0xb0] sm:$0xff]
      %v552 = vld [vmem:[%s4 + $0xb8] sm:$0xff]
      %v553 = vld [vmem:[%s4 + $0xc0] sm:$0xff]
      %v554 = vld [vmem:[%s4 + $0xc8] sm:$0xff]
      %v555 = vld [vmem:[%s4 + $0xd0] sm:$0xff]
      %v556 = vld [vmem:[%s4 + $0xd8] sm:$0xff]
      %v557 = vld [vmem:[%s4 + $0xe0] sm:$0xff]
      %v558 = vld [vmem:[%s4 + $0xe8] sm:$0xff]
      %v559 = vld [vmem:[%s4 + $0xf0] sm:$0xff]
      %v560 = vld [vmem:[%s4 + $0xf8] sm:$0xff]
      %v561 = vld [vmem:[%s4 + $0x100] sm:$0xff]
      %v562 = vld [vmem:[%s4 + $0x108] sm:$0xff]
      %v563 = vld [vmem:[%s4 + $0x110] sm:$0xff]
      %v564 = vld [vmem:[%s4 + $0x118] sm:$0xff]
      %v565 = vld [vmem:[%s4 + $0x120] sm:$0xff]
      %v566 = vld [vmem:[%s4 + $0x128] sm:$0xff]
      %v567 = vld [vmem:[%s4 + $0x130] sm:$0xff]
      %v568 = vld [vmem:[%s4 + $0x138] sm:$0xff]
      %v569 = vld [vmem:[%s4 + $0x140] sm:$0xff]
      %v570 = vld [vmem:[%s4 + $0x148] sm:$0xff]
      %v571 = vld [vmem:[%s4 + $0x150] sm:$0xff]
      %v572 = vld [vmem:[%s4 + $0x158] sm:$0xff]
      %v573 = vld [vmem:[%s4 + $0x160] sm:$0xff]
      %v574 = vld [vmem:[%s4 + $0x168] sm:$0xff]
      %v575 = vld [vmem:[%s4 + $0x170] sm:$0xff]
      %v576 = vld [vmem:[%s4 + $0x178] sm:$0xff]
      %577 = vmatprep.subr.mxu0 0.0
      %578 = vmatpush1.msra.mxu0 %v529
      %579 = vmatprep.subr.mxu0 0.0
      %580 = vmatpush1.msra.mxu0 %v530
      %581 = vmatprep.subr.mxu0 0.0
      %582 = vmatpush1.msra.mxu0 %v531
      %583 = vmatprep.subr.mxu0 0.0
      %584 = vmatpush1.msra.mxu0 %v532
      %585 = vmatprep.subr.mxu0 0.0
      %586 = vmatpush1.msra.mxu0 %v533
      %587 = vmatprep.subr.mxu0 0.0
      %588 = vmatpush1.msra.mxu0 %v534
      %589 = vmatprep.subr.mxu0 0.0
      %590 = vmatpush1.msra.mxu0 %v535
      %591 = vmatprep.subr.mxu0 0.0
      %592 = vmatpush1.msra.mxu0 %v536
      %593 = vmatprep.subr.mxu0 0.0
      %594 = vmatpush1.msra.mxu0 %v537
      %595 = vmatprep.subr.mxu0 0.0
      %596 = vmatpush1.msra.mxu0 %v538
      %597 = vmatprep.subr.mxu0 0.0
      %598 = vmatpush1.msra.mxu0 %v539
      %599 = vmatprep.subr.mxu0 0.0
      %600 = vmatpush1.msra.mxu0 %v540
      %601 = vmatprep.subr.mxu0 0.0
      %602 = vmatpush1.msra.mxu0 %v541
      %603 = vmatprep.subr.mxu0 0.0
      %604 = vmatpush1.msra.mxu0 %v542
      %605 = vmatprep.subr.mxu0 0.0
      %606 = vmatpush1.msra.mxu0 %v543
      %607 = vmatprep.subr.mxu0 0.0
      %608 = vmatpush1.msra.mxu0 %v544
      %609 = vmatprep.subr.mxu0 0.0
      %610 = vmatpush1.msra.mxu0 %v545
      %611 = vmatprep.subr.mxu0 0.0
      %612 = vmatpush1.msra.mxu0 %v546
      %613 = vmatprep.subr.mxu0 0.0
      %614 = vmatpush1.msra.mxu0 %v547
      %615 = vmatprep.subr.mxu0 0.0
      %616 = vmatpush1.msra.mxu0 %v548
      %617 = vmatprep.subr.mxu0 0.0
      %618 = vmatpush1.msra.mxu0 %v549
      %619 = vmatprep.subr.mxu0 0.0
      %620 = vmatpush1.msra.mxu0 %v550
      %621 = vmatprep.subr.mxu0 0.0
      %622 = vmatpush1.msra.mxu0 %v551
      %623 = vmatprep.subr.mxu0 0.0
      %624 = vmatpush1.msra.mxu0 %v552
      %625 = vmatprep.subr.mxu0 0.0
      %626 = vmatpush1.msra.mxu0 %v553
      %627 = vmatprep.subr.mxu0 0.0
      %628 = vmatpush1.msra.mxu0 %v554
      %629 = vmatprep.subr.mxu0 0.0
      %630 = vmatpush1.msra.mxu0 %v555
      %631 = vmatprep.subr.mxu0 0.0
      %632 = vmatpush1.msra.mxu0 %v556
      %633 = vmatprep.subr.mxu0 0.0
      %634 = vmatpush1.msra.mxu0 %v557
      %635 = vmatprep.subr.mxu0 0.0
      %636 = vmatpush1.msra.mxu0 %v558
      %637 = vmatprep.subr.mxu0 0.0
      %638 = vmatpush1.msra.mxu0 %v559
      %639 = vmatprep.subr.mxu0 0.0
      %640 = vmatpush1.msra.mxu0 %v560
      %641 = vmatprep.mubr.f32.mxu0 %v513
      %642 = vmatmul.mubr.f32.gmra.mrb[0].mxu0 %v522
      %v643 = vpop.f32.mrb[0].mxu0
      %v644 = vadd.f32 0.0, %v643
      %v645 = vpop.f32.mrb[0].mxu0
      %646 = vmatprep.mubr.f32.mxu0 %v514
      %647 = vmatmul.mubr.f32.gmra.mrb[0].mxu0 %v519
      %v648 = vpop.f32.mrb[0].mxu0
      %v649 = vadd.f32 0.0, %v648
      %v650 = vpop.f32.mrb[0].mxu0
      %651 = vdwg.mxu0
      %652 = vmatprep.subr.mxu0 0.0
      %653 = vmatpush1.msra.mxu0 %v561
      %654 = vmatprep.subr.mxu0 0.0
      %655 = vmatpush1.msra.mxu0 %v562
      %656 = vmatprep.subr.mxu0 0.0
      %657 = vmatpush1.msra.mxu0 %v563
      %658 = vmatprep.subr.mxu0 0.0
      %659 = vmatpush1.msra.mxu0 %v564
      %660 = vmatprep.subr.mxu0 0.0
      %661 = vmatpush1.msra.mxu0 %v565
      %662 = vmatprep.subr.mxu0 0.0
      %663 = vmatpush1.msra.mxu0 %v566
      %664 = vmatprep.subr.mxu0 0.0
      %665 = vmatpush1.msra.mxu0 %v567
      %666 = vmatprep.subr.mxu0 0.0
      %667 = vmatpush1.msra.mxu0 %v568
      %668 = vmatprep.subr.mxu0 0.0
      %669 = vmatpush1.msra.mxu0 %v569
      %670 = vmatprep.subr.mxu0 0.0
      %671 = vmatpush1.msra.mxu0 %v570
      %672 = vmatprep.subr.mxu0 0.0
      %673 = vmatpush1.msra.mxu0 %v571
      %674 = vmatprep.subr.mxu0 0.0
      %675 = vmatpush1.msra.mxu0 %v572
      %676 = vmatprep.subr.mxu0 0.0
      %677 = vmatpush1.msra.mxu0 %v573
      %678 = vmatprep.subr.mxu0 0.0
      %679 = vmatpush1.msra.mxu0 %v574
      %680 = vmatprep.subr.mxu0 0.0
      %681 = vmatpush1.msra.mxu0 %v575
      %682 = vmatprep.subr.mxu0 0.0
      %683 = vmatpush1.msra.mxu0 %v576
      %684 = vmatprep.subr.mxu0 0.0
      %685 = vmatpush1.msra.mxu0 0.0
      %686 = vmatprep.subr.mxu0 0.0
      %687 = vmatpush1.msra.mxu0 0.0
      %688 = vmatprep.subr.mxu0 0.0
      %689 = vmatpush1.msra.mxu0 0.0
      %690 = vmatprep.subr.mxu0 0.0
      %691 = vmatpush1.msra.mxu0 0.0
      %692 = vmatprep.subr.mxu0 0.0
      %693 = vmatpush1.msra.mxu0 0.0
      %694 = vmatprep.subr.mxu0 0.0
      %695 = vmatpush1.msra.mxu0 0.0
      %696 = vmatprep.subr.mxu0 0.0
      %697 = vmatpush1.msra.mxu0 0.0
      %698 = vmatprep.subr.mxu0 0.0
      %699 = vmatpush1.msra.mxu0 0.0
      %700 = vmatprep.subr.mxu0 0.0
      %701 = vmatpush1.msra.mxu0 0.0
      %702 = vmatprep.subr.mxu0 0.0
      %703 = vmatpush1.msra.mxu0 0.0
      %704 = vmatprep.subr.mxu0 0.0
      %705 = vmatpush1.msra.mxu0 0.0
      %706 = vmatprep.subr.mxu0 0.0
      %707 = vmatpush1.msra.mxu0 0.0
      %708 = vmatprep.subr.mxu0 0.0
      %709 = vmatpush1.msra.mxu0 0.0
      %710 = vmatprep.subr.mxu0 0.0
      %711 = vmatpush1.msra.mxu0 0.0
      %712 = vmatprep.subr.mxu0 0.0
      %713 = vmatpush1.msra.mxu0 0.0
      %714 = vmatprep.subr.mxu0 0.0
      %715 = vmatpush1.msra.mxu0 0.0
      %716 = vmatprep.mubr.f32.mxu0 0.0
      %717 = vmatmul.mubr.f32.gmra.mrb[0].mxu0 %v525
      %v718 = vpop.f32.mrb[0].mxu0
      %v719 = vadd.f32 %v644, %v718
      %v720 = vpop.f32.mrb[0].mxu0
      %721 = vmatprep.mubr.f32.mxu0 0.0
      %722 = vmatmul.mubr.f32.gmra.mrb[0].mxu0 %v528
      %v723 = vpop.f32.mrb[0].mxu0
      %v724 = vadd.f32 %v649, %v723
      %v725 = vpop.f32.mrb[0].mxu0
      %726 = vdwg.mxu0
      %v727 = vld [vmem:[%s5] sm:$0x1]
      %v729 = vlaneseq
      %v730 = vshrl.u32 %v729, 7
      %v731 = vsub.s32 0, %v730
      %v732 = vrot.slane %v727, %v731
      %v734 = vmul.f32 %v719, %v732
      %v735 = vmul.f32 %v724, %v732
      %v736 = vld [vmem:[%s6] sm:$0x1]
      %v738 = vlaneseq
      %v739 = vshrl.u32 %v738, 7
      %v740 = vsub.s32 0, %v739
      %v741 = vrot.slane %v736, %v740
      %v743 = vadd.f32 %v734, %v741
      %v744 = vadd.f32 %v735, %v741
      %v745 = vadd.f32 %v743, %v279
      %v746 = vadd.f32 %v744, %v280
      %v747 = vmax.f32 %v745, 0.0
      %v748 = vmax.f32 %v746, 0.0
      %749 = vst [vmem:[%s278] sm:$0xff] %v747
      %750 = vst [vmem:[%s278 + $0x8] sm:$0xff] %v748
      %p751 = scmp.lt.s32.totalorder %s18, 1
      %s752 = scalar_select %p751, %s18, 1
      %s753 = smul.addr %s752, 2
      %s754 = smul.addr %s753, 8
      %s755 = scalar_lea.vmem %s7, %s754
      // Predicated region
      $region49: #{baseblock_forward_nhwc.1} parent=47 // pred_check
        %p756 = pneg %p188
      $region50: #{baseblock_forward_nhwc.1} parent=47 // pred_check_branch
        %758 = sbr.rel (%p756) target = $region52
      $region51: #{baseblock_forward_nhwc.1} parent=47 // pred_region
        _
      $region52: #{baseblock_forward_nhwc.1} parent=47 // pred_fallthru
        _
    $region48: #{baseblock_forward_nhwc.1} parent=5 // pred_fallthru
      _
    %p759 = scmp.le.s32.totalorder 2, %s13
    // Predicated region
    $region53: #{baseblock_forward_nhwc.1} parent=5 // pred_check
      %p760 = pneg %p759
    $region54: #{baseblock_forward_nhwc.1} parent=5 // pred_check_branch
      %762 = sbr.rel (%p760) target = $region56
    $region55: #{baseblock_forward_nhwc.1} parent=5 // pred_region
      %s763 = ssub.s32 %s13, 2
      // Predicated region
      $region57: #{baseblock_forward_nhwc.1} parent=55 // pred_check
        %p764 = pneg %p194
      $region58: #{baseblock_forward_nhwc.1} parent=55 // pred_check_branch
        %766 = sbr.rel (%p764) target = $region60
      $region59: #{baseblock_forward_nhwc.1} parent=55 // pred_region
        %p767 = scmp.lt.s32.totalorder %s19, 1
        %s768 = scalar_select %p767, %s19, 1
        %s769 = smul.addr %s768, 2
        %s770 = smul.addr %s769, 8
        %s771 = scalar_lea.vmem %s7, %s770
      $region60: #{baseblock_forward_nhwc.1} parent=55 // pred_fallthru
        _
    $region56: #{baseblock_forward_nhwc.1} parent=5 // pred_fallthru
      _
  $region6: #{baseblock_forward_nhwc.1} parent=0 // loop_footer
    %s17 = sadd.s32 1, %s13
  $region7: #{baseblock_forward_nhwc.1} parent=0 // loop_footer_branch
    %12 = sbr.rel target = $region3
  $region8: #{baseblock_forward_nhwc.1} parent=0 // loop_exit
    _

</llo_original>
